<compile_context>
chip_gen: v7x
topology: tpu7x:2x2x1
jax: 0.10.0
libtpu: 0.0.40
codegen_flags: <defaults>
</compile_context>

<pallas_src>
import functools

import jax
import jax.numpy as jnp
from jax import lax
from jax.experimental import pallas as pl
from jax.experimental.pallas import tpu as pltpu


def _layer_norm(x, g, b, eps=1e-5):
    # PyTorch nn.LayerNorm over last dim (biased variance, eps=1e-5), two-pass.
    mu = jnp.mean(x, axis=-1, keepdims=True)
    d = x - mu
    var = jnp.mean(d * d, axis=-1, keepdims=True)
    return d * lax.rsqrt(var + eps) * g + b


def encoder_layer_kernel(n_sub, sub_rows,
                         alpha_ref,                            # SMEM scalar prefetch: sigmoid(raw_alpha)
                         x_ref, wmix_ref, w1_ref, w2_ref, pvec_ref, b1_ref,
                         out_ref):
    alpha = alpha_ref[0]
    # Packed (8, D) f32 parameter slab rows:
    #   0: bmix  1: b2  2: g1  3: be1  4: g2  5: be2  6: g3  7: be3
    bmix = pvec_ref[0:1, :]
    b2 = pvec_ref[1:2, :]
    g1 = pvec_ref[2:3, :]
    be1 = pvec_ref[3:4, :]
    g2 = pvec_ref[4:5, :]
    be2 = pvec_ref[5:6, :]
    g3 = pvec_ref[6:7, :]
    be3 = pvec_ref[7:8, :]
    b1 = b1_ref[...]

    def chunk(c, carry):
        r0 = pl.multiple_of(c * sub_rows, sub_rows)
        sl = pl.ds(r0, sub_rows)
        x = x_ref[sl, :].astype(jnp.float32)                   # (sub, D)

        # forward / reversed "attention" (position-wise linear; seq flips cancel);
        # the AttentionMixer alpha is already folded into (wmix, bmix) on the host.
        mixed = jnp.dot(x.astype(jnp.bfloat16), wmix_ref[...],
                        preferred_element_type=jnp.float32) + bmix

        h = jnp.maximum(x + mixed, 0.0)                        # x = relu(x + new_x)
        x1 = _layer_norm(h, g1, be1)                           # y = x = norm1(x)

        # conv1 (k=1) + relu, then conv2 (k=1); dropout = identity (eval mode).
        y = jnp.dot(x1.astype(jnp.bfloat16), w1_ref[...],
                    preferred_element_type=jnp.float32) + b1
        y = jnp.maximum(y, 0.0)
        y = jnp.dot(y.astype(jnp.bfloat16), w2_ref[...],
                    preferred_element_type=jnp.float32) + b2

        m = _layer_norm(x1 + y, g2, be2)                       # m_out = norm2(x + y)

        # Re-read x from the VMEM-resident input tile (cheap vld) instead of
        # keeping the f32 upcast live across three matmuls + three LayerNorms.
        # TODO(synk): `_x` is undefined in the reference forward; interpreted as
        # the original layer input x (the common residual-save pattern).
        x0 = x_ref[sl, :].astype(jnp.float32)
        f = _layer_norm(alpha * m + (1.0 - alpha) * x0, g3, be3)  # norm3(mixer(m_out, _x))
        out_ref[sl, :] = f.astype(out_ref.dtype)
        return carry

    # Independent row sub-chunks, unrolled so the LN/VPU/EUP work of chunk i
    # can overlap the MXU matmuls of chunk i+1.
    lax.fori_loop(0, n_sub, chunk, 0, unroll=True)


def _single_buffer_spec(shape, index_map):
    """Constant-index weight block: single-buffered if supported (halves resident VMEM)."""
    if hasattr(pl, "Buffered"):
        for kw in (dict(), dict(buffer_count=1)):
            try:
                buf = pl.Buffered(1) if not kw else pl.Buffered(**kw)
                return pl.BlockSpec(shape, index_map, pipeline_mode=buf)
            except TypeError:
                continue
    return pl.BlockSpec(shape, index_map)


def encoder_layer(x, params, *, tm=None, sub_rows=128):
    B, L, D = x.shape
    F_ = params["w1"].shape[1]
    rows = B * L
    io_bytes = jnp.dtype(x.dtype).itemsize

    # --- per-generation VMEM budgeting (64 MiB/TC on v7x, 128 MiB on v5e/v6e) ---
    try:
        vmem_cap = int(pltpu.get_tpu_info().vmem_capacity_bytes)
    except Exception:
        vmem_cap = 64 * 1024 * 1024                     # conservative default (v7x per-TC)

    if tm is None:
        tm = 512 if vmem_cap >= 96 * 1024 * 1024 else 256
    tm = max(8, (int(tm) // 8) * 8)
    tm = min(tm, pl.cdiv(rows, 8) * 8)

    # Resident weights (bf16, single-buffered) + packed f32 param slabs.
    weight_bytes = 2 * (D * D + 2 * D * F_) + 4 * (8 * D + F_)

    def footprint(t):
        io = 2 * t * D * io_bytes * 2                    # in + out tiles, double-buffered
        sub_est = sub_rows if (t % sub_rows == 0 and t > sub_rows) else t
        inter = sub_est * (6 * D + 2 * F_) * 4           # f32 intermediates per sub-chunk
        return 2 * weight_bytes + io + inter             # 2x weight margin if Buffered(1) unavailable

    while tm > 8 and footprint(tm) > int(0.8 * vmem_cap):
        tm = max(8, ((tm // 2) // 8) * 8)

    if tm % sub_rows == 0 and tm // sub_rows >= 2:
        n_sub, sub = tm // sub_rows, sub_rows
    else:
        n_sub, sub = 1, tm

    # --- host-side parameter prep -------------------------------------------
    # AttentionMixer folded into the attention weights (both branches linear):
    #   a*(x@Wf+bf) + (1-a)*(x@Wr+br) = x@Wmix + bmix
    alpha = jax.nn.sigmoid(params["raw_alpha"].reshape(()).astype(jnp.float32))
    w_mix = (alpha * params["wf"] + (1.0 - alpha) * params["wr"]).astype(jnp.bfloat16)
    b_mix = (alpha * params["bf"] + (1.0 - alpha) * params["br"]).astype(jnp.float32)
    w1 = params["w1"].astype(jnp.bfloat16)
    w2 = params["w2"].astype(jnp.bfloat16)
    # Pack the tiny (1,D) biases / LN params into one sublane-aligned (8, D) slab.
    pvec = jnp.concatenate(
        [b_mix, params["b2"], params["g1"], params["be1"],
         params["g2"], params["be2"], params["g3"], params["be3"]],
        axis=0).astype(jnp.float32)                      # (8, D)
    b1 = params["b1"].astype(jnp.float32)                # (1, F)
    alpha_sm = alpha.reshape((1,))                       # SMEM scalar-prefetch operand

    # Activations stream in their native dtype: no wrapper-side cast / pad pass.
    # A ragged last row-tile relies on Pallas block clipping (rows are
    # independent; out-of-bounds output rows are dropped).
    x2 = x.reshape(rows, D)

    grid = (pl.cdiv(rows, tm),)
    # index_maps receive the scalar-prefetch ref as a trailing positional arg.
    row_spec = pl.BlockSpec((tm, D), lambda i, a: (i, 0))

    est = footprint(tm)
    vmem_limit = int(min(max(2 * est, 32 * 1024 * 1024), int(0.85 * vmem_cap)))

    cost = pl.CostEstimate(
        flops=int(2 * rows * D * (D + 2 * F_)),
        transcendentals=int(3 * rows),
        bytes_accessed=int(2 * rows * D * io_bytes + weight_bytes),
    )

    def build(single_buffer_weights):
        def wspec(shape):
            n = len(shape)
            idx = lambda i, a, _n=n: (0,) * _n           # constant index: DMA'd once, VMEM-resident
            if single_buffer_weights:
                return _single_buffer_spec(shape, idx)
            return pl.BlockSpec(shape, idx)

        return pl.pallas_call(
            functools.partial(encoder_layer_kernel, n_sub, sub),
            out_shape=jax.ShapeDtypeStruct((rows, D), x.dtype),
            grid_spec=pltpu.PrefetchScalarGridSpec(
                num_scalar_prefetch=1,                    # alpha lives in SMEM
                grid=grid,
                in_specs=[row_spec,
                          wspec((D, D)),                  # folded attention Wmix (bf16)
                          wspec((D, F_)),                 # conv1 weight (bf16)
                          wspec((F_, D)),                 # conv2 weight (bf16)
                          wspec((8, D)),                  # packed biases / LN params (f32)
                          wspec((1, F_))],                # conv1 bias (f32)
                out_specs=row_spec),
            compiler_params=pltpu.CompilerParams(
                dimension_semantics=("parallel",),        # row tiles shard across TCs (v7x)
                vmem_limit_bytes=vmem_limit),
            cost_estimate=cost,
        )

    args = (alpha_sm, x2, w_mix, w1, w2, pvec, b1)
    try:
        out = build(True)(*args)
    except Exception:
        # Fallback: default double-buffered weight blocks (footprint already budgets 2x).
        out = build(False)(*args)

    attn = 1  # matches `attn = 1` in the reference forward
    return out.reshape(B, L, D), attn


def encoder_layer_ref(x, params):
    """Pure-JAX f32 reference of the same forward (for tolerance checking)."""
    B, L, D = x.shape
    a = jax.nn.sigmoid(params["raw_alpha"].reshape(()))
    xf = x.reshape(B * L, D).astype(jnp.float32)

    def ln(v, g, b, eps=1e-5):
        mu = v.mean(-1, keepdims=True)
        var = ((v - mu) ** 2).mean(-1, keepdims=True)
        return (v - mu) / jnp.sqrt(var + eps) * g + b

    fwd = xf @ params["wf"] + params["bf"]
    rev = xf @ params["wr"] + params["br"]                # seq flips cancel (position-wise map)
    new_x = a * fwd + (1.0 - a) * rev
    h = jnp.maximum(xf + new_x, 0.0)
    x1 = ln(h, params["g1"], params["be1"])
    y = jnp.maximum(x1 @ params["w1"] + params["b1"], 0.0)
    y = y @ params["w2"] + params["b2"]
    m = ln(x1 + y, params["g2"], params["be2"])
    f = ln(a * m + (1.0 - a) * xf, params["g3"], params["be3"])
    return f.reshape(B, L, D)


def init_params(key, d_model, d_ff):
    ks = jax.random.split(key, 8)

    def uinit(k, shape, fan_in):
        lim = 1.0 / jnp.sqrt(jnp.float32(fan_in))
        return jax.random.uniform(k, shape, jnp.float32, -lim, lim)

    return {
        # position-wise "attention" linears
        "wf": uinit(ks[0], (d_model, d_model), d_model),
        "bf": uinit(ks[1], (1, d_model), d_model),
        "wr": uinit(ks[2], (d_model, d_model), d_model),
        "br": uinit(ks[3], (1, d_model), d_model),
        # conv1: Conv1d(d_model -> d_ff, k=1)  (stored transposed: (D, F))
        "w1": uinit(ks[4], (d_model, d_ff), d_model),
        "b1": uinit(ks[5], (1, d_ff), d_model),
        # conv2: Conv1d(d_ff -> d_model, k=1)  (stored transposed: (F, D))
        "w2": uinit(ks[6], (d_ff, d_model), d_ff),
        "b2": uinit(ks[7], (1, d_model), d_ff),
        # LayerNorms (default init: gamma=1, beta=0)
        "g1": jnp.ones((1, d_model), jnp.float32),
        "be1": jnp.zeros((1, d_model), jnp.float32),
        "g2": jnp.ones((1, d_model), jnp.float32),
        "be2": jnp.zeros((1, d_model), jnp.float32),
        "g3": jnp.ones((1, d_model), jnp.float32),
        "be3": jnp.zeros((1, d_model), jnp.float32),
        # AttentionMixer.raw_alpha init = 0.0  ->  alpha = 0.5
        "raw_alpha": jnp.zeros((1, 1), jnp.float32),
    }


if __name__ == "__main__":
    B, L, D = 2, 8, 32
    d_ff = 4 * D  # 128

    key = jax.random.PRNGKey(0)
    k_x, k_p = jax.random.split(key)
    x = jax.random.normal(k_x, (B, L, D), jnp.float32)
    params = init_params(k_p, D, d_ff)

    f_out, attn = encoder_layer(x, params)               # tm auto-capped for small row counts
    f_out = jax.block_until_ready(f_out)

    assert f_out.shape == (B, L, D)
    assert bool(jnp.all(jnp.isfinite(f_out)))
    assert attn == 1

    ref = encoder_layer_ref(x, params)
    max_err = float(jnp.max(jnp.abs(f_out.astype(jnp.float32) - ref)))
    assert max_err < 0.1, f"kernel deviates from f32 reference: max abs err {max_err}"

    print("KERNEL_OK")
</pallas_src>

<mosaic_0001>
module attributes {stable_mosaic.version = 11 : i64} {
  func.func @encoder_layer_kernel(%arg0: i32, %arg1: memref<1xf32, #tpu.memory_space<smem>>, %arg2: memref<16x32xf32, #tpu.memory_space<vmem>>, %arg3: memref<32x32xbf16, #tpu.memory_space<vmem>>, %arg4: memref<32x128xbf16, #tpu.memory_space<vmem>>, %arg5: memref<128x32xbf16, #tpu.memory_space<vmem>>, %arg6: memref<8x32xf32, #tpu.memory_space<vmem>>, %arg7: memref<1x128xf32, #tpu.memory_space<vmem>>, %arg8: memref<16x32xf32, #tpu.memory_space<vmem>>) attributes {dimension_semantics = [#tpu.dimension_semantics<parallel>], iteration_bounds = array<i64: 1>, scalar_prefetch = 1 : i64, scratch_operands = 0 : i64, tpu.core_type = #tpu.core_type<tc>, window_params = [{transform_indices = @transform_0, window_bounds = array<i64: 16, 32>}, {pipeline_mode = #tpu.pipeline_mode<synchronous>, transform_indices = @transform_1, window_bounds = array<i64: 32, 32>}, {pipeline_mode = #tpu.pipeline_mode<synchronous>, transform_indices = @transform_2, window_bounds = array<i64: 32, 128>}, {pipeline_mode = #tpu.pipeline_mode<synchronous>, transform_indices = @transform_3, window_bounds = array<i64: 128, 32>}, {pipeline_mode = #tpu.pipeline_mode<synchronous>, transform_indices = @transform_4, window_bounds = array<i64: 8, 32>}, {pipeline_mode = #tpu.pipeline_mode<synchronous>, transform_indices = @transform_5, window_bounds = array<i64: 1, 128>}, {transform_indices = @transform_6, window_bounds = array<i64: 16, 32>}]} {
    %c0 = arith.constant 0 : index
    %0 = memref.load %arg1[%c0] : memref<1xf32, #tpu.memory_space<smem>>
    %c0_0 = arith.constant 0 : index
    %c0_1 = arith.constant 0 : index
    %1 = vector.load %arg6[%c0_0, %c0_1] : memref<8x32xf32, #tpu.memory_space<vmem>>, vector<1x32xf32>
    %c1 = arith.constant 1 : index
    %c0_2 = arith.constant 0 : index
    %2 = vector.load %arg6[%c1, %c0_2] : memref<8x32xf32, #tpu.memory_space<vmem>>, vector<1x32xf32>
    %c2 = arith.constant 2 : index
    %c0_3 = arith.constant 0 : index
    %3 = vector.load %arg6[%c2, %c0_3] : memref<8x32xf32, #tpu.memory_space<vmem>>, vector<1x32xf32>
    %c3 = arith.constant 3 : index
    %c0_4 = arith.constant 0 : index
    %4 = vector.load %arg6[%c3, %c0_4] : memref<8x32xf32, #tpu.memory_space<vmem>>, vector<1x32xf32>
    %c4 = arith.constant 4 : index
    %c0_5 = arith.constant 0 : index
    %5 = vector.load %arg6[%c4, %c0_5] : memref<8x32xf32, #tpu.memory_space<vmem>>, vector<1x32xf32>
    %c5 = arith.constant 5 : index
    %c0_6 = arith.constant 0 : index
    %6 = vector.load %arg6[%c5, %c0_6] : memref<8x32xf32, #tpu.memory_space<vmem>>, vector<1x32xf32>
    %c6 = arith.constant 6 : index
    %c0_7 = arith.constant 0 : index
    %7 = vector.load %arg6[%c6, %c0_7] : memref<8x32xf32, #tpu.memory_space<vmem>>, vector<1x32xf32>
    %c7 = arith.constant 7 : index
    %c0_8 = arith.constant 0 : index
    %8 = vector.load %arg6[%c7, %c0_8] : memref<8x32xf32, #tpu.memory_space<vmem>>, vector<1x32xf32>
    %c0_9 = arith.constant 0 : index
    %c0_10 = arith.constant 0 : index
    %9 = vector.load %arg7[%c0_9, %c0_10] : memref<1x128xf32, #tpu.memory_space<vmem>>, vector<1x128xf32>
    %c0_i32 = arith.constant 0 : i32
    %c16_i32 = arith.constant 16 : i32
    %10 = arith.muli %c0_i32, %c16_i32 : i32
    %11 = tpu.assume_multiple %10, 16 : i32
    %12 = arith.index_cast %11 : i32 to index
    %c0_11 = arith.constant 0 : index
    %13 = vector.load %arg2[%12, %c0_11] : memref<16x32xf32, #tpu.memory_space<vmem>>, vector<16x32xf32>
    %14 = arith.truncf %13 : vector<16x32xf32> to vector<16x32xbf16>
    %c0_12 = arith.constant 0 : index
    %c0_13 = arith.constant 0 : index
    %15 = vector.load %arg3[%c0_12, %c0_13] : memref<32x32xbf16, #tpu.memory_space<vmem>>, vector<32x32xbf16>
    %cst = arith.constant dense<0.000000e+00> : vector<16x32xf32>
    %16 = tpu.matmul %14, %15, %cst {dimension_numbers = #tpu.dot_dimension_numbers<[1], [0], [0], [1], [0, 0, 1, 1], [], []>} : vector<16x32xbf16>, vector<32x32xbf16>, vector<16x32xf32> -> vector<16x32xf32>
    %17 = vector.broadcast %1 : vector<1x32xf32> to vector<16x32xf32>
    %18 = arith.addf %16, %17 : vector<16x32xf32>
    %19 = arith.addf %13, %18 : vector<16x32xf32>
    %cst_14 = arith.constant 0.000000e+00 : f32
    %20 = vector.broadcast %cst_14 : f32 to vector<16x32xf32>
    %21 = arith.maximumf %19, %20 : vector<16x32xf32>
    %cst_15 = arith.constant dense<0.000000e+00> : vector<16xf32>
    %22 = vector.multi_reduction <add>, %21, %cst_15 [1] : vector<16x32xf32> to vector<16xf32>
    %23 = vector.shape_cast %22 : vector<16xf32> to vector<16x1xf32>
    %cst_16 = arith.constant 3.200000e+01 : f32
    %24 = vector.broadcast %cst_16 : f32 to vector<16x1xf32>
    %25 = arith.divf %23, %24 : vector<16x1xf32>
    %26 = vector.broadcast %25 : vector<16x1xf32> to vector<16x32xf32>
    %27 = arith.subf %21, %26 : vector<16x32xf32>
    %28 = arith.mulf %27, %27 : vector<16x32xf32>
    %cst_17 = arith.constant dense<0.000000e+00> : vector<16xf32>
    %29 = vector.multi_reduction <add>, %28, %cst_17 [1] : vector<16x32xf32> to vector<16xf32>
    %30 = vector.shape_cast %29 : vector<16xf32> to vector<16x1xf32>
    %cst_18 = arith.constant 3.200000e+01 : f32
    %31 = vector.broadcast %cst_18 : f32 to vector<16x1xf32>
    %32 = arith.divf %30, %31 : vector<16x1xf32>
    %cst_19 = arith.constant 9.99999974E-6 : f32
    %33 = vector.broadcast %cst_19 : f32 to vector<16x1xf32>
    %34 = arith.addf %32, %33 : vector<16x1xf32>
    %35 = math.rsqrt %34 : vector<16x1xf32>
    %36 = vector.broadcast %35 : vector<16x1xf32> to vector<16x32xf32>
    %37 = arith.mulf %27, %36 : vector<16x32xf32>
    %38 = vector.broadcast %3 : vector<1x32xf32> to vector<16x32xf32>
    %39 = arith.mulf %37, %38 : vector<16x32xf32>
    %40 = vector.broadcast %4 : vector<1x32xf32> to vector<16x32xf32>
    %41 = arith.addf %39, %40 : vector<16x32xf32>
    %42 = arith.truncf %41 : vector<16x32xf32> to vector<16x32xbf16>
    %c0_20 = arith.constant 0 : index
    %c0_21 = arith.constant 0 : index
    %43 = vector.load %arg4[%c0_20, %c0_21] : memref<32x128xbf16, #tpu.memory_space<vmem>>, vector<32x128xbf16>
    %cst_22 = arith.constant dense<0.000000e+00> : vector<16x128xf32>
    %44 = tpu.matmul %42, %43, %cst_22 {dimension_numbers = #tpu.dot_dimension_numbers<[1], [0], [0], [1], [0, 0, 1, 1], [], []>} : vector<16x32xbf16>, vector<32x128xbf16>, vector<16x128xf32> -> vector<16x128xf32>
    %45 = vector.broadcast %9 : vector<1x128xf32> to vector<16x128xf32>
    %46 = arith.addf %44, %45 : vector<16x128xf32>
    %cst_23 = arith.constant 0.000000e+00 : f32
    %47 = vector.broadcast %cst_23 : f32 to vector<16x128xf32>
    %48 = arith.maximumf %46, %47 : vector<16x128xf32>
    %49 = arith.truncf %48 : vector<16x128xf32> to vector<16x128xbf16>
    %c0_24 = arith.constant 0 : index
    %c0_25 = arith.constant 0 : index
    %50 = vector.load %arg5[%c0_24, %c0_25] : memref<128x32xbf16, #tpu.memory_space<vmem>>, vector<128x32xbf16>
    %cst_26 = arith.constant dense<0.000000e+00> : vector<16x32xf32>
    %51 = tpu.matmul %49, %50, %cst_26 {dimension_numbers = #tpu.dot_dimension_numbers<[1], [0], [0], [1], [0, 0, 1, 1], [], []>} : vector<16x128xbf16>, vector<128x32xbf16>, vector<16x32xf32> -> vector<16x32xf32>
    %52 = vector.broadcast %2 : vector<1x32xf32> to vector<16x32xf32>
    %53 = arith.addf %51, %52 : vector<16x32xf32>
    %54 = arith.addf %41, %53 : vector<16x32xf32>
    %cst_27 = arith.constant dense<0.000000e+00> : vector<16xf32>
    %55 = vector.multi_reduction <add>, %54, %cst_27 [1] : vector<16x32xf32> to vector<16xf32>
    %56 = vector.shape_cast %55 : vector<16xf32> to vector<16x1xf32>
    %cst_28 = arith.constant 3.200000e+01 : f32
    %57 = vector.broadcast %cst_28 : f32 to vector<16x1xf32>
    %58 = arith.divf %56, %57 : vector<16x1xf32>
    %59 = vector.broadcast %58 : vector<16x1xf32> to vector<16x32xf32>
    %60 = arith.subf %54, %59 : vector<16x32xf32>
    %61 = arith.mulf %60, %60 : vector<16x32xf32>
    %cst_29 = arith.constant dense<0.000000e+00> : vector<16xf32>
    %62 = vector.multi_reduction <add>, %61, %cst_29 [1] : vector<16x32xf32> to vector<16xf32>
    %63 = vector.shape_cast %62 : vector<16xf32> to vector<16x1xf32>
    %cst_30 = arith.constant 3.200000e+01 : f32
    %64 = vector.broadcast %cst_30 : f32 to vector<16x1xf32>
    %65 = arith.divf %63, %64 : vector<16x1xf32>
    %cst_31 = arith.constant 9.99999974E-6 : f32
    %66 = vector.broadcast %cst_31 : f32 to vector<16x1xf32>
    %67 = arith.addf %65, %66 : vector<16x1xf32>
    %68 = math.rsqrt %67 : vector<16x1xf32>
    %69 = vector.broadcast %68 : vector<16x1xf32> to vector<16x32xf32>
    %70 = arith.mulf %60, %69 : vector<16x32xf32>
    %71 = vector.broadcast %5 : vector<1x32xf32> to vector<16x32xf32>
    %72 = arith.mulf %70, %71 : vector<16x32xf32>
    %73 = vector.broadcast %6 : vector<1x32xf32> to vector<16x32xf32>
    %74 = arith.addf %72, %73 : vector<16x32xf32>
    %75 = arith.index_cast %11 : i32 to index
    %c0_32 = arith.constant 0 : index
    %76 = vector.load %arg2[%75, %c0_32] : memref<16x32xf32, #tpu.memory_space<vmem>>, vector<16x32xf32>
    %77 = vector.broadcast %0 : f32 to vector<16x32xf32>
    %78 = arith.mulf %77, %74 : vector<16x32xf32>
    %cst_33 = arith.constant 1.000000e+00 : f32
    %79 = arith.subf %cst_33, %0 : f32
    %80 = vector.broadcast %79 : f32 to vector<16x32xf32>
    %81 = arith.mulf %80, %76 : vector<16x32xf32>
    %82 = arith.addf %78, %81 : vector<16x32xf32>
    %cst_34 = arith.constant dense<0.000000e+00> : vector<16xf32>
    %83 = vector.multi_reduction <add>, %82, %cst_34 [1] : vector<16x32xf32> to vector<16xf32>
    %84 = vector.shape_cast %83 : vector<16xf32> to vector<16x1xf32>
    %cst_35 = arith.constant 3.200000e+01 : f32
    %85 = vector.broadcast %cst_35 : f32 to vector<16x1xf32>
    %86 = arith.divf %84, %85 : vector<16x1xf32>
    %87 = vector.broadcast %86 : vector<16x1xf32> to vector<16x32xf32>
    %88 = arith.subf %82, %87 : vector<16x32xf32>
    %89 = arith.mulf %88, %88 : vector<16x32xf32>
    %cst_36 = arith.constant dense<0.000000e+00> : vector<16xf32>
    %90 = vector.multi_reduction <add>, %89, %cst_36 [1] : vector<16x32xf32> to vector<16xf32>
    %91 = vector.shape_cast %90 : vector<16xf32> to vector<16x1xf32>
    %cst_37 = arith.constant 3.200000e+01 : f32
    %92 = vector.broadcast %cst_37 : f32 to vector<16x1xf32>
    %93 = arith.divf %91, %92 : vector<16x1xf32>
    %cst_38 = arith.constant 9.99999974E-6 : f32
    %94 = vector.broadcast %cst_38 : f32 to vector<16x1xf32>
    %95 = arith.addf %93, %94 : vector<16x1xf32>
    %96 = math.rsqrt %95 : vector<16x1xf32>
    %97 = vector.broadcast %96 : vector<16x1xf32> to vector<16x32xf32>
    %98 = arith.mulf %88, %97 : vector<16x32xf32>
    %99 = vector.broadcast %7 : vector<1x32xf32> to vector<16x32xf32>
    %100 = arith.mulf %98, %99 : vector<16x32xf32>
    %101 = vector.broadcast %8 : vector<1x32xf32> to vector<16x32xf32>
    %102 = arith.addf %100, %101 : vector<16x32xf32>
    %103 = arith.index_cast %11 : i32 to index
    %c0_39 = arith.constant 0 : index
    %104 = vector.load %arg8[%103, %c0_39] : memref<16x32xf32, #tpu.memory_space<vmem>>, vector<16x32xf32>
    tpu.vector_store %arg8[%103, %c0_39], %102 {strides = array<i32>} : memref<16x32xf32, #tpu.memory_space<vmem>>, vector<16x32xf32>,
    %c1_i32 = arith.constant 1 : i32
    return
  }
  func.func @transform_0(%arg0: i32, %arg1: memref<1xf32, #tpu.memory_space<smem>>) -> (i32, i32) {
    %c0_i32 = arith.constant 0 : i32
    %c0_i32_0 = arith.constant 0 : i32
    return %arg0, %c0_i32 : i32, i32
  }
  func.func @transform_1(%arg0: i32, %arg1: memref<1xf32, #tpu.memory_space<smem>>) -> (i32, i32) {
    %c0_i32 = arith.constant 0 : i32
    %c0_i32_0 = arith.constant 0 : i32
    %c0_i32_1 = arith.constant 0 : i32
    return %c0_i32, %c0_i32_0 : i32, i32
  }
  func.func @transform_2(%arg0: i32, %arg1: memref<1xf32, #tpu.memory_space<smem>>) -> (i32, i32) {
    %c0_i32 = arith.constant 0 : i32
    %c0_i32_0 = arith.constant 0 : i32
    %c0_i32_1 = arith.constant 0 : i32
    return %c0_i32, %c0_i32_0 : i32, i32
  }
  func.func @transform_3(%arg0: i32, %arg1: memref<1xf32, #tpu.memory_space<smem>>) -> (i32, i32) {
    %c0_i32 = arith.constant 0 : i32
    %c0_i32_0 = arith.constant 0 : i32
    %c0_i32_1 = arith.constant 0 : i32
    return %c0_i32, %c0_i32_0 : i32, i32
  }
  func.func @transform_4(%arg0: i32, %arg1: memref<1xf32, #tpu.memory_space<smem>>) -> (i32, i32) {
    %c0_i32 = arith.constant 0 : i32
    %c0_i32_0 = arith.constant 0 : i32
    %c0_i32_1 = arith.constant 0 : i32
    return %c0_i32, %c0_i32_0 : i32, i32
  }
  func.func @transform_5(%arg0: i32, %arg1: memref<1xf32, #tpu.memory_space<smem>>) -> (i32, i32) {
    %c0_i32 = arith.constant 0 : i32
    %c0_i32_0 = arith.constant 0 : i32
    %c0_i32_1 = arith.constant 0 : i32
    return %c0_i32, %c0_i32_0 : i32, i32
  }
  func.func @transform_6(%arg0: i32, %arg1: memref<1xf32, #tpu.memory_space<smem>>) -> (i32, i32) {
    %c0_i32 = arith.constant 0 : i32
    %c0_i32_0 = arith.constant 0 : i32
    return %arg0, %c0_i32 : i32, i32
  }
}

module attributes {stable_mosaic.version = 11 : i64} {
  func.func @encoder_layer_kernel(%arg0: i32, %arg1: memref<1xf32, #tpu.memory_space<smem>>, %arg2: memref<16x32xf32, #tpu.memory_space<vmem>>, %arg3: memref<32x32xbf16, #tpu.memory_space<vmem>>, %arg4: memref<32x128xbf16, #tpu.memory_space<vmem>>, %arg5: memref<128x32xbf16, #tpu.memory_space<vmem>>, %arg6: memref<8x32xf32, #tpu.memory_space<vmem>>, %arg7: memref<1x128xf32, #tpu.memory_space<vmem>>, %arg8: memref<16x32xf32, #tpu.memory_space<vmem>>) attributes {dimension_semantics = [#tpu.dimension_semantics<parallel>], iteration_bounds = array<i64: 1>, scalar_prefetch = 1 : i64, scratch_operands = 0 : i64, tpu.core_type = #tpu.core_type<tc>, window_params = [{transform_indices = @transform_0, window_bounds = array<i64: 16, 32>}, {pipeline_mode = #tpu.pipeline_mode<synchronous>, transform_indices = @transform_1, window_bounds = array<i64: 32, 32>}, {pipeline_mode = #tpu.pipeline_mode<synchronous>, transform_indices = @transform_2, window_bounds = array<i64: 32, 128>}, {pipeline_mode = #tpu.pipeline_mode<synchronous>, transform_indices = @transform_3, window_bounds = array<i64: 128, 32>}, {pipeline_mode = #tpu.pipeline_mode<synchronous>, transform_indices = @transform_4, window_bounds = array<i64: 8, 32>}, {pipeline_mode = #tpu.pipeline_mode<synchronous>, transform_indices = @transform_5, window_bounds = array<i64: 1, 128>}, {transform_indices = @transform_6, window_bounds = array<i64: 16, 32>}]} {
    %c0 = arith.constant 0 : index
    %0 = memref.load %arg1[%c0] : memref<1xf32, #tpu.memory_space<smem>>
    %c0_0 = arith.constant 0 : index
    %c0_1 = arith.constant 0 : index
    %1 = vector.load %arg6[%c0_0, %c0_1] : memref<8x32xf32, #tpu.memory_space<vmem>>, vector<1x32xf32>
    %c1 = arith.constant 1 : index
    %c0_2 = arith.constant 0 : index
    %2 = vector.load %arg6[%c1, %c0_2] : memref<8x32xf32, #tpu.memory_space<vmem>>, vector<1x32xf32>
    %c2 = arith.constant 2 : index
    %c0_3 = arith.constant 0 : index
    %3 = vector.load %arg6[%c2, %c0_3] : memref<8x32xf32, #tpu.memory_space<vmem>>, vector<1x32xf32>
    %c3 = arith.constant 3 : index
    %c0_4 = arith.constant 0 : index
    %4 = vector.load %arg6[%c3, %c0_4] : memref<8x32xf32, #tpu.memory_space<vmem>>, vector<1x32xf32>
    %c4 = arith.constant 4 : index
    %c0_5 = arith.constant 0 : index
    %5 = vector.load %arg6[%c4, %c0_5] : memref<8x32xf32, #tpu.memory_space<vmem>>, vector<1x32xf32>
    %c5 = arith.constant 5 : index
    %c0_6 = arith.constant 0 : index
    %6 = vector.load %arg6[%c5, %c0_6] : memref<8x32xf32, #tpu.memory_space<vmem>>, vector<1x32xf32>
    %c6 = arith.constant 6 : index
    %c0_7 = arith.constant 0 : index
    %7 = vector.load %arg6[%c6, %c0_7] : memref<8x32xf32, #tpu.memory_space<vmem>>, vector<1x32xf32>
    %c7 = arith.constant 7 : index
    %c0_8 = arith.constant 0 : index
    %8 = vector.load %arg6[%c7, %c0_8] : memref<8x32xf32, #tpu.memory_space<vmem>>, vector<1x32xf32>
    %c0_9 = arith.constant 0 : index
    %c0_10 = arith.constant 0 : index
    %9 = vector.load %arg7[%c0_9, %c0_10] : memref<1x128xf32, #tpu.memory_space<vmem>>, vector<1x128xf32>
    %c0_i32 = arith.constant 0 : i32
    %c16_i32 = arith.constant 16 : i32
    %10 = arith.muli %c0_i32, %c16_i32 : i32
    %11 = tpu.assume_multiple %10, 16 : i32
    %12 = arith.index_cast %11 : i32 to index
    %c0_11 = arith.constant 0 : index
    %13 = vector.load %arg2[%12, %c0_11] : memref<16x32xf32, #tpu.memory_space<vmem>>, vector<16x32xf32>
    %14 = arith.truncf %13 : vector<16x32xf32> to vector<16x32xbf16>
    %c0_12 = arith.constant 0 : index
    %c0_13 = arith.constant 0 : index
    %15 = vector.load %arg3[%c0_12, %c0_13] : memref<32x32xbf16, #tpu.memory_space<vmem>>, vector<32x32xbf16>
    %cst = arith.constant dense<0.000000e+00> : vector<16x32xf32>
    %16 = tpu.matmul %14, %15, %cst {dimension_numbers = #tpu.dot_dimension_numbers<[1], [0], [0], [1], [0, 0, 1, 1], [], []>} : vector<16x32xbf16>, vector<32x32xbf16>, vector<16x32xf32> -> vector<16x32xf32>
    %17 = vector.broadcast %1 : vector<1x32xf32> to vector<16x32xf32>
    %18 = arith.addf %16, %17 : vector<16x32xf32>
    %19 = arith.addf %13, %18 : vector<16x32xf32>
    %cst_14 = arith.constant 0.000000e+00 : f32
    %20 = vector.broadcast %cst_14 : f32 to vector<16x32xf32>
    %21 = arith.maximumf %19, %20 : vector<16x32xf32>
    %cst_15 = arith.constant dense<0.000000e+00> : vector<16xf32>
    %22 = vector.multi_reduction <add>, %21, %cst_15 [1] : vector<16x32xf32> to vector<16xf32>
    %23 = vector.shape_cast %22 : vector<16xf32> to vector<16x1xf32>
    %cst_16 = arith.constant 3.200000e+01 : f32
    %24 = vector.broadcast %cst_16 : f32 to vector<16x1xf32>
    %25 = arith.divf %23, %24 : vector<16x1xf32>
    %26 = vector.broadcast %25 : vector<16x1xf32> to vector<16x32xf32>
    %27 = arith.subf %21, %26 : vector<16x32xf32>
    %28 = arith.mulf %27, %27 : vector<16x32xf32>
    %cst_17 = arith.constant dense<0.000000e+00> : vector<16xf32>
    %29 = vector.multi_reduction <add>, %28, %cst_17 [1] : vector<16x32xf32> to vector<16xf32>
    %30 = vector.shape_cast %29 : vector<16xf32> to vector<16x1xf32>
    %cst_18 = arith.constant 3.200000e+01 : f32
    %31 = vector.broadcast %cst_18 : f32 to vector<16x1xf32>
    %32 = arith.divf %30, %31 : vector<16x1xf32>
    %cst_19 = arith.constant 9.99999974E-6 : f32
    %33 = vector.broadcast %cst_19 : f32 to vector<16x1xf32>
    %34 = arith.addf %32, %33 : vector<16x1xf32>
    %35 = math.rsqrt %34 : vector<16x1xf32>
    %36 = vector.broadcast %35 : vector<16x1xf32> to vector<16x32xf32>
    %37 = arith.mulf %27, %36 : vector<16x32xf32>
    %38 = vector.broadcast %3 : vector<1x32xf32> to vector<16x32xf32>
    %39 = arith.mulf %37, %38 : vector<16x32xf32>
    %40 = vector.broadcast %4 : vector<1x32xf32> to vector<16x32xf32>
    %41 = arith.addf %39, %40 : vector<16x32xf32>
    %42 = arith.truncf %41 : vector<16x32xf32> to vector<16x32xbf16>
    %c0_20 = arith.constant 0 : index
    %c0_21 = arith.constant 0 : index
    %43 = vector.load %arg4[%c0_20, %c0_21] : memref<32x128xbf16, #tpu.memory_space<vmem>>, vector<32x128xbf16>
    %cst_22 = arith.constant dense<0.000000e+00> : vector<16x128xf32>
    %44 = tpu.matmul %42, %43, %cst_22 {dimension_numbers = #tpu.dot_dimension_numbers<[1], [0], [0], [1], [0, 0, 1, 1], [], []>} : vector<16x32xbf16>, vector<32x128xbf16>, vector<16x128xf32> -> vector<16x128xf32>
    %45 = vector.broadcast %9 : vector<1x128xf32> to vector<16x128xf32>
    %46 = arith.addf %44, %45 : vector<16x128xf32>
    %cst_23 = arith.constant 0.000000e+00 : f32
    %47 = vector.broadcast %cst_23 : f32 to vector<16x128xf32>
    %48 = arith.maximumf %46, %47 : vector<16x128xf32>
    %49 = arith.truncf %48 : vector<16x128xf32> to vector<16x128xbf16>
    %c0_24 = arith.constant 0 : index
    %c0_25 = arith.constant 0 : index
    %50 = vector.load %arg5[%c0_24, %c0_25] : memref<128x32xbf16, #tpu.memory_space<vmem>>, vector<128x32xbf16>
    %cst_26 = arith.constant dense<0.000000e+00> : vector<16x32xf32>
    %51 = tpu.matmul %49, %50, %cst_26 {dimension_numbers = #tpu.dot_dimension_numbers<[1], [0], [0], [1], [0, 0, 1, 1], [], []>} : vector<16x128xbf16>, vector<128x32xbf16>, vector<16x32xf32> -> vector<16x32xf32>
    %52 = vector.broadcast %2 : vector<1x32xf32> to vector<16x32xf32>
    %53 = arith.addf %51, %52 : vector<16x32xf32>
    %54 = arith.addf %41, %53 : vector<16x32xf32>
    %cst_27 = arith.constant dense<0.000000e+00> : vector<16xf32>
    %55 = vector.multi_reduction <add>, %54, %cst_27 [1] : vector<16x32xf32> to vector<16xf32>
    %56 = vector.shape_cast %55 : vector<16xf32> to vector<16x1xf32>
    %cst_28 = arith.constant 3.200000e+01 : f32
    %57 = vector.broadcast %cst_28 : f32 to vector<16x1xf32>
    %58 = arith.divf %56, %57 : vector<16x1xf32>
    %59 = vector.broadcast %58 : vector<16x1xf32> to vector<16x32xf32>
    %60 = arith.subf %54, %59 : vector<16x32xf32>
    %61 = arith.mulf %60, %60 : vector<16x32xf32>
    %cst_29 = arith.constant dense<0.000000e+00> : vector<16xf32>
    %62 = vector.multi_reduction <add>, %61, %cst_29 [1] : vector<16x32xf32> to vector<16xf32>
    %63 = vector.shape_cast %62 : vector<16xf32> to vector<16x1xf32>
    %cst_30 = arith.constant 3.200000e+01 : f32
    %64 = vector.broadcast %cst_30 : f32 to vector<16x1xf32>
    %65 = arith.divf %63, %64 : vector<16x1xf32>
    %cst_31 = arith.constant 9.99999974E-6 : f32
    %66 = vector.broadcast %cst_31 : f32 to vector<16x1xf32>
    %67 = arith.addf %65, %66 : vector<16x1xf32>
    %68 = math.rsqrt %67 : vector<16x1xf32>
    %69 = vector.broadcast %68 : vector<16x1xf32> to vector<16x32xf32>
    %70 = arith.mulf %60, %69 : vector<16x32xf32>
    %71 = vector.broadcast %5 : vector<1x32xf32> to vector<16x32xf32>
    %72 = arith.mulf %70, %71 : vector<16x32xf32>
    %73 = vector.broadcast %6 : vector<1x32xf32> to vector<16x32xf32>
    %74 = arith.addf %72, %73 : vector<16x32xf32>
    %75 = arith.index_cast %11 : i32 to index
    %c0_32 = arith.constant 0 : index
    %76 = vector.load %arg2[%75, %c0_32] : memref<16x32xf32, #tpu.memory_space<vmem>>, vector<16x32xf32>
    %77 = vector.broadcast %0 : f32 to vector<16x32xf32>
    %78 = arith.mulf %77, %74 : vector<16x32xf32>
    %cst_33 = arith.constant 1.000000e+00 : f32
    %79 = arith.subf %cst_33, %0 : f32
    %80 = vector.broadcast %79 : f32 to vector<16x32xf32>
    %81 = arith.mulf %80, %76 : vector<16x32xf32>
    %82 = arith.addf %78, %81 : vector<16x32xf32>
    %cst_34 = arith.constant dense<0.000000e+00> : vector<16xf32>
    %83 = vector.multi_reduction <add>, %82, %cst_34 [1] : vector<16x32xf32> to vector<16xf32>
    %84 = vector.shape_cast %83 : vector<16xf32> to vector<16x1xf32>
    %cst_35 = arith.constant 3.200000e+01 : f32
    %85 = vector.broadcast %cst_35 : f32 to vector<16x1xf32>
    %86 = arith.divf %84, %85 : vector<16x1xf32>
    %87 = vector.broadcast %86 : vector<16x1xf32> to vector<16x32xf32>
    %88 = arith.subf %82, %87 : vector<16x32xf32>
    %89 = arith.mulf %88, %88 : vector<16x32xf32>
    %cst_36 = arith.constant dense<0.000000e+00> : vector<16xf32>
    %90 = vector.multi_reduction <add>, %89, %cst_36 [1] : vector<16x32xf32> to vector<16xf32>
    %91 = vector.shape_cast %90 : vector<16xf32> to vector<16x1xf32>
    %cst_37 = arith.constant 3.200000e+01 : f32
    %92 = vector.broadcast %cst_37 : f32 to vector<16x1xf32>
    %93 = arith.divf %91, %92 : vector<16x1xf32>
    %cst_38 = arith.constant 9.99999974E-6 : f32
    %94 = vector.broadcast %cst_38 : f32 to vector<16x1xf32>
    %95 = arith.addf %93, %94 : vector<16x1xf32>
    %96 = math.rsqrt %95 : vector<16x1xf32>
    %97 = vector.broadcast %96 : vector<16x1xf32> to vector<16x32xf32>
    %98 = arith.mulf %88, %97 : vector<16x32xf32>
    %99 = vector.broadcast %7 : vector<1x32xf32> to vector<16x32xf32>
    %100 = arith.mulf %98, %99 : vector<16x32xf32>
    %101 = vector.broadcast %8 : vector<1x32xf32> to vector<16x32xf32>
    %102 = arith.addf %100, %101 : vector<16x32xf32>
    %103 = arith.index_cast %11 : i32 to index
    %c0_39 = arith.constant 0 : index
    %104 = vector.load %arg8[%103, %c0_39] : memref<16x32xf32, #tpu.memory_space<vmem>>, vector<16x32xf32>
    tpu.vector_store %arg8[%103, %c0_39], %102 {strides = array<i32>} : memref<16x32xf32, #tpu.memory_space<vmem>>, vector<16x32xf32>,
    %c1_i32 = arith.constant 1 : i32
    return
  }
  func.func @transform_0(%arg0: i32, %arg1: memref<1xf32, #tpu.memory_space<smem>>) -> (i32, i32) {
    %c0_i32 = arith.constant 0 : i32
    %c0_i32_0 = arith.constant 0 : i32
    return %arg0, %c0_i32 : i32, i32
  }
  func.func @transform_1(%arg0: i32, %arg1: memref<1xf32, #tpu.memory_space<smem>>) -> (i32, i32) {
    %c0_i32 = arith.constant 0 : i32
    %c0_i32_0 = arith.constant 0 : i32
    %c0_i32_1 = arith.constant 0 : i32
    return %c0_i32, %c0_i32_0 : i32, i32
  }
  func.func @transform_2(%arg0: i32, %arg1: memref<1xf32, #tpu.memory_space<smem>>) -> (i32, i32) {
    %c0_i32 = arith.constant 0 : i32
    %c0_i32_0 = arith.constant 0 : i32
    %c0_i32_1 = arith.constant 0 : i32
    return %c0_i32, %c0_i32_0 : i32, i32
  }
  func.func @transform_3(%arg0: i32, %arg1: memref<1xf32, #tpu.memory_space<smem>>) -> (i32, i32) {
    %c0_i32 = arith.constant 0 : i32
    %c0_i32_0 = arith.constant 0 : i32
    %c0_i32_1 = arith.constant 0 : i32
    return %c0_i32, %c0_i32_0 : i32, i32
  }
  func.func @transform_4(%arg0: i32, %arg1: memref<1xf32, #tpu.memory_space<smem>>) -> (i32, i32) {
    %c0_i32 = arith.constant 0 : i32
    %c0_i32_0 = arith.constant 0 : i32
    %c0_i32_1 = arith.constant 0 : i32
    return %c0_i32, %c0_i32_0 : i32, i32
  }
  func.func @transform_5(%arg0: i32, %arg1: memref<1xf32, #tpu.memory_space<smem>>) -> (i32, i32) {
    %c0_i32 = arith.constant 0 : i32
    %c0_i32_0 = arith.constant 0 : i32
    %c0_i32_1 = arith.constant 0 : i32
    return %c0_i32, %c0_i32_0 : i32, i32
  }
  func.func @transform_6(%arg0: i32, %arg1: memref<1xf32, #tpu.memory_space<smem>>) -> (i32, i32) {
    %c0_i32 = arith.constant 0 : i32
    %c0_i32_0 = arith.constant 0 : i32
    return %arg0, %c0_i32 : i32, i32
  }
}

</mosaic_0001>

<llo_original>
// kernel: tpu_custom_call.1
$region0: #{tpu_custom_call.1}
  #allocation0 [shape = 'u32[]', space=smem, size = 0x4, offset = 0x4, fixed_abs, tag = 'smem constant byte address 0x4 - core index']
  #allocation1 [shape = 'u32[144,128]{1,0:T(1,128)}', space=vmem, size = 0x12000, scoped, tag = 'internal scratch']
  #allocation2 [shape = 's32[1]{0}', space=sflag, size = 0x4, scoped, tag = 'scoped memory for tpu_custom_call.1']
  #allocation3 [shape = 'f32[1]{0:T(128)S(6)}', space=smem, size = 0x200, scoped, tag = 'prefetched SMEM operand 0']
  %s0 = inlined_call_operand.<no memory space> [shape: f32[1], index: 0, kind: input, shape index: {}]
  %s1 = inlined_call_operand.vmem [shape: f32[16,32], index: 1, kind: input, shape index: {}]
  %s2 = inlined_call_operand.vmem [shape: bf16[32,32], index: 2, kind: input, shape index: {}]
  %s3 = inlined_call_operand.vmem [shape: bf16[32,128], index: 3, kind: input, shape index: {}]
  %s4 = inlined_call_operand.vmem [shape: bf16[128,32], index: 4, kind: input, shape index: {}]
  %s5 = inlined_call_operand.vmem [shape: f32[8,32], index: 5, kind: input, shape index: {}]
  %s6 = inlined_call_operand.vmem [shape: f32[1,128], index: 6, kind: input, shape index: {}]
  %s7 = inlined_call_operand.hbm [shape: f32[16,32], index: 7, kind: output, shape index: {}]
  %s8 = sld [smem:[#allocation0]]
  $region34: #{tpu_custom_call.1} parent=0
    _
  %s10 = ssub.s32 1, %s8
  %s11 = scalar_select 0, %s10, %s8
  %12 = sst [smem:[#allocation3]] %s0
  $region1: #{tpu_custom_call.1} parent=0
    #allocation4 [shape = 'u8[8192]{0}', space=vmem, size = 0x2000, scoped, tag = 'output window, operand 0, single buffered']
    #allocation5 [shape = 's32[1]{0}', space=sflag, size = 0x4, scoped, tag = 'scoped memory for tpu_custom_call.1']
    %13 = vsyncpa [#allocation5], 0
    // Predicated region
    $region2: #{tpu_custom_call.1} parent=1 // pred_check
      _
    $region3: #{tpu_custom_call.1} parent=1 // pred_check_branch
      %15 = sbr.rel (0) target = $region5
    $region4: #{tpu_custom_call.1} parent=1 // pred_region
      _
    $region5: #{tpu_custom_call.1} parent=1 // pred_fallthru
      _
    // Predicated region
    $region6: #{tpu_custom_call.1} parent=1 // pred_check
      _
    $region7: #{tpu_custom_call.1} parent=1 // pred_check_branch
      %17 = sbr.rel (0) target = $region9
    $region8: #{tpu_custom_call.1} parent=1 // pred_region
      _
    $region9: #{tpu_custom_call.1} parent=1 // pred_fallthru
      _
    // Predicated region
    $region10: #{tpu_custom_call.1} parent=1 // pred_check
      _
    $region11: #{tpu_custom_call.1} parent=1 // pred_check_branch
      %19 = sbr.rel (0) target = $region13
    $region12: #{tpu_custom_call.1} parent=1 // pred_region
      _
    $region13: #{tpu_custom_call.1} parent=1 // pred_fallthru
      _
    // Predicated region
    $region14: #{tpu_custom_call.1} parent=1 // pred_check
      _
    $region15: #{tpu_custom_call.1} parent=1 // pred_check_branch
      %21 = sbr.rel (0) target = $region17
    $region16: #{tpu_custom_call.1} parent=1 // pred_region
      _
    $region17: #{tpu_custom_call.1} parent=1 // pred_fallthru
      _
    // Predicated region
    $region18: #{tpu_custom_call.1} parent=1 // pred_check
      _
    $region19: #{tpu_custom_call.1} parent=1 // pred_check_branch
      %23 = sbr.rel (0) target = $region21
    $region20: #{tpu_custom_call.1} parent=1 // pred_region
      _
    $region21: #{tpu_custom_call.1} parent=1 // pred_fallthru
      _
    // Predicated region
    $region22: #{tpu_custom_call.1} parent=1 // pred_check
      _
    $region23: #{tpu_custom_call.1} parent=1 // pred_check_branch
      %25 = sbr.rel (0) target = $region25
    $region24: #{tpu_custom_call.1} parent=1 // pred_region
      _
    $region25: #{tpu_custom_call.1} parent=1 // pred_fallthru
      _
    %s27 = sld [smem:[#allocation3]]
    %v28 = vld [vmem:[%s5] sm:$0x1]
    %v29 = vld [vmem:[%s5 + $0x1] sm:$0x1]
    %v30 = vld [vmem:[%s5 + $0x2] sm:$0x1]
    %v31 = vld [vmem:[%s5 + $0x3] sm:$0x1]
    %v32 = vld [vmem:[%s5 + $0x4] sm:$0x1]
    %v33 = vld [vmem:[%s5 + $0x5] sm:$0x1]
    %v34 = vld [vmem:[%s5 + $0x6] sm:$0x1]
    %v35 = vld [vmem:[%s5 + $0x7] sm:$0x1]
    %v36 = vld [vmem:[%s6] sm:$0x1]
    %v37 = vld [vmem:[%s1] sm:$0xff]
    %v38 = vld [vmem:[%s1 + $0x8] sm:$0xff]
    %v39 = vpack.c.bf16 %v38, %v37
    %v40 = vld [vmem:[%s2] sm:$0xf]
    %v41 = vld [vmem:[%s2 + $0x4] sm:$0xf]
    %v42 = vld [vmem:[%s2 + $0x8] sm:$0xf]
    %v43 = vld [vmem:[%s2 + $0xc] sm:$0xf]
    %v44 = vlaneseq
    %v45 = vshrl.u32 %v44, 7
    %v46 = vsub.s32 0, %v45
    %v47 = vrot.slane %v28, %v46
    %v52 = vunpack.c.l.b16 %v40
    %v53 = vunpack.c.l.b16 %v41
    %v54 = vunpack.c.l.b16 %v42
    %v55 = vunpack.c.l.b16 %v43
    %v56 = vpack.c.b16 %v53, %v52
    %v57 = vpack.c.b16 %v55, %v54
    %vm60 = vcmask 261120
    %v62 = vsel %vm60, %v39, 0
    %64 = vmatprep.subr.bf16.mxu0 0
    %65 = vmatpush1.bf16.msra.mxu0 %v56
    %66 = vmatprep.subr.bf16.mxu0 0
    %67 = vmatpush1.bf16.msra.mxu0 %v57
    %68 = vmatprep.subr.bf16.mxu0 0
    %69 = vmatpush1.bf16.msra.mxu0 0
    %70 = vmatprep.subr.bf16.mxu0 0
    %71 = vmatpush1.bf16.msra.mxu0 0
    %72 = vmatprep.subr.bf16.mxu0 0
    %73 = vmatpush1.bf16.msra.mxu0 0
    %74 = vmatprep.subr.bf16.mxu0 0
    %75 = vmatpush1.bf16.msra.mxu0 0
    %76 = vmatprep.subr.bf16.mxu0 0
    %77 = vmatpush1.bf16.msra.mxu0 0
    %78 = vmatprep.subr.bf16.mxu0 0
    %79 = vmatpush1.bf16.msra.mxu0 0
    %80 = vmatprep.subr.bf16.mxu0 0
    %81 = vmatpush1.bf16.msra.mxu0 0
    %82 = vmatprep.subr.bf16.mxu0 0
    %83 = vmatpush1.bf16.msra.mxu0 0
    %84 = vmatprep.subr.bf16.mxu0 0
    %85 = vmatpush1.bf16.msra.mxu0 0
    %86 = vmatprep.subr.bf16.mxu0 0
    %87 = vmatpush1.bf16.msra.mxu0 0
    %88 = vmatprep.subr.bf16.mxu0 0
    %89 = vmatpush1.bf16.msra.mxu0 0
    %90 = vmatprep.subr.bf16.mxu0 0
    %91 = vmatpush1.bf16.msra.mxu0 0
    %92 = vmatprep.subr.bf16.mxu0 0
    %93 = vmatpush1.bf16.msra.mxu0 0
    %94 = vmatprep.subr.bf16.mxu0 0
    %95 = vmatpush1.bf16.msra.mxu0 0
    %96 = vmatprep.mubr.bf16.mxu0 0
    %97 = vmatmul.mubr.bf16.gmra.mrb[0].mxu0 %v62
    %v98 = vpop.f32.mrb[0].mxu0
    %v99 = vadd.f32 %v47, %v98
    %v100 = vpop.f32.mrb[0].mxu0
    %v101 = vpop.f32.mrb[0].mxu0
    %v102 = vadd.f32 %v47, %v101
    %v103 = vpop.f32.mrb[0].mxu0
    %104 = vdwg.mxu0
    %v105 = vadd.f32 %v37, %v99
    %v106 = vadd.f32 %v38, %v102
    %v107 = vmax.f32 %v105, 0.0
    %v108 = vmax.f32 %v106, 0.0
    %v109 = vsel %vm60, %v107, 0.0
    %110 = vadd.xlane.f32.xlu0 %v109
    %v111 = vpop.xlane.xlu0 %110
    %v112 = vsel %vm60, %v108, 0.0
    %113 = vadd.xlane.f32.xlu0 %v112
    %v114 = vpop.xlane.xlu0 %113
    %v115 = vrcp.pop 32.0
    %v116 = vmul.f32 %v111, %v115
    %v117 = vmul.f32 %v114, %v115
    %v118 = vsub.f32 %v107, %v116
    %v119 = vsub.f32 %v108, %v117
    %v120 = vmul.f32 %v118, %v118
    %v121 = vmul.f32 %v119, %v119
    %v122 = vsel %vm60, %v120, 0.0
    %123 = vadd.xlane.f32.xlu0 %v122
    %v124 = vpop.xlane.xlu0 %123
    %v125 = vsel %vm60, %v121, 0.0
    %126 = vadd.xlane.f32.xlu0 %v125
    %v127 = vpop.xlane.xlu0 %126
    %v128 = vmul.f32 %v124, %v115
    %v129 = vmul.f32 %v127, %v115
    %v130 = vadd.f32 %v128, 1e-05
    %v131 = vadd.f32 %v129, 1e-05
    %v132 = vrsqrt.pop %v130
    %v133 = vrsqrt.pop %v131
    %v134 = vmul.f32 %v118, %v132
    %v135 = vmul.f32 %v119, %v133
    %v136 = vlaneseq
    %v137 = vshrl.u32 %v136, 7
    %v138 = vsub.s32 0, %v137
    %v139 = vrot.slane %v30, %v138
    %v140 = vmul.f32 %v134, %v139
    %v141 = vmul.f32 %v135, %v139
    %v142 = vlaneseq
    %v143 = vshrl.u32 %v142, 7
    %v144 = vsub.s32 0, %v143
    %v145 = vrot.slane %v31, %v144
    %v146 = vadd.f32 %v140, %v145
    %v147 = vadd.f32 %v141, %v145
    %v148 = vpack.c.bf16 %v147, %v146
    %v149 = vld [vmem:[%s3] sm:$0xf]
    %v150 = vld [vmem:[%s3 + $0x4] sm:$0xf]
    %v151 = vld [vmem:[%s3 + $0x8] sm:$0xf]
    %v152 = vld [vmem:[%s3 + $0xc] sm:$0xf]
    %v154 = vlaneseq
    %v155 = vshrl.u32 %v154, 7
    %v156 = vsub.s32 0, %v155
    %v157 = vrot.slane %v36, %v156
    %v163 = vunpack.c.l.b16 %v149
    %v164 = vunpack.c.l.b16 %v150
    %v165 = vunpack.c.l.b16 %v151
    %v166 = vunpack.c.l.b16 %v152
    %v167 = vpack.c.b16 %v164, %v163
    %v168 = vpack.c.b16 %v166, %v165
    %v172 = vsel %vm60, %v148, 0
    %174 = vmatprep.subr.bf16.mxu0 0
    %175 = vmatpush1.bf16.msra.mxu0 %v167
    %176 = vmatprep.subr.bf16.mxu0 0
    %177 = vmatpush1.bf16.msra.mxu0 %v168
    %178 = vmatprep.subr.bf16.mxu0 0
    %179 = vmatpush1.bf16.msra.mxu0 0
    %180 = vmatprep.subr.bf16.mxu0 0
    %181 = vmatpush1.bf16.msra.mxu0 0
    %182 = vmatprep.subr.bf16.mxu0 0
    %183 = vmatpush1.bf16.msra.mxu0 0
    %184 = vmatprep.subr.bf16.mxu0 0
    %185 = vmatpush1.bf16.msra.mxu0 0
    %186 = vmatprep.subr.bf16.mxu0 0
    %187 = vmatpush1.bf16.msra.mxu0 0
    %188 = vmatprep.subr.bf16.mxu0 0
    %189 = vmatpush1.bf16.msra.mxu0 0
    %190 = vmatprep.subr.bf16.mxu0 0
    %191 = vmatpush1.bf16.msra.mxu0 0
    %192 = vmatprep.subr.bf16.mxu0 0
    %193 = vmatpush1.bf16.msra.mxu0 0
    %194 = vmatprep.subr.bf16.mxu0 0
    %195 = vmatpush1.bf16.msra.mxu0 0
    %196 = vmatprep.subr.bf16.mxu0 0
    %197 = vmatpush1.bf16.msra.mxu0 0
    %198 = vmatprep.subr.bf16.mxu0 0
    %199 = vmatpush1.bf16.msra.mxu0 0
    %200 = vmatprep.subr.bf16.mxu0 0
    %201 = vmatpush1.bf16.msra.mxu0 0
    %202 = vmatprep.subr.bf16.mxu0 0
    %203 = vmatpush1.bf16.msra.mxu0 0
    %204 = vmatprep.subr.bf16.mxu0 0
    %205 = vmatpush1.bf16.msra.mxu0 0
    %206 = vmatprep.mubr.bf16.mxu0 0
    %207 = vmatmul.mubr.bf16.gmra.mrb[0].mxu0 %v172
    %v208 = vpop.f32.mrb[0].mxu0
    %v209 = vadd.f32 %v157, %v208
    %v210 = vpop.f32.mrb[0].mxu0
    %v211 = vpop.f32.mrb[0].mxu0
    %v212 = vadd.f32 %v157, %v211
    %v213 = vpop.f32.mrb[0].mxu0
    %214 = vdwg.mxu0
    %v215 = vmax.f32 %v209, 0.0
    %v216 = vmax.f32 %v212, 0.0
    %v217 = vpack.c.bf16 %v216, %v215
    %v218 = vld [vmem:[%s4] sm:$0xf]
    %v219 = vld [vmem:[%s4 + $0x4] sm:$0xf]
    %v220 = vld [vmem:[%s4 + $0x8] sm:$0xf]
    %v221 = vld [vmem:[%s4 + $0xc] sm:$0xf]
    %v222 = vld [vmem:[%s4 + $0x10] sm:$0xf]
    %v223 = vld [vmem:[%s4 + $0x14] sm:$0xf]
    %v224 = vld [vmem:[%s4 + $0x18] sm:$0xf]
    %v225 = vld [vmem:[%s4 + $0x1c] sm:$0xf]
    %v226 = vld [vmem:[%s4 + $0x20] sm:$0xf]
    %v227 = vld [vmem:[%s4 + $0x24] sm:$0xf]
    %v228 = vld [vmem:[%s4 + $0x28] sm:$0xf]
    %v229 = vld [vmem:[%s4 + $0x2c] sm:$0xf]
    %v230 = vld [vmem:[%s4 + $0x30] sm:$0xf]
    %v231 = vld [vmem:[%s4 + $0x34] sm:$0xf]
    %v232 = vld [vmem:[%s4 + $0x38] sm:$0xf]
    %v233 = vld [vmem:[%s4 + $0x3c] sm:$0xf]
    %v234 = vlaneseq
    %v235 = vshrl.u32 %v234, 7
    %v236 = vsub.s32 0, %v235
    %v237 = vrot.slane %v29, %v236
    %v254 = vunpack.c.l.b16 %v218
    %v255 = vunpack.c.l.b16 %v219
    %v256 = vunpack.c.l.b16 %v220
    %v257 = vunpack.c.l.b16 %v221
    %v258 = vunpack.c.l.b16 %v222
    %v259 = vunpack.c.l.b16 %v223
    %v260 = vunpack.c.l.b16 %v224
    %v261 = vunpack.c.l.b16 %v225
    %v262 = vunpack.c.l.b16 %v226
    %v263 = vunpack.c.l.b16 %v227
    %v264 = vunpack.c.l.b16 %v228
    %v265 = vunpack.c.l.b16 %v229
    %v266 = vunpack.c.l.b16 %v230
    %v267 = vunpack.c.l.b16 %v231
    %v268 = vunpack.c.l.b16 %v232
    %v269 = vunpack.c.l.b16 %v233
    %v270 = vpack.c.b16 %v255, %v254
    %v271 = vpack.c.b16 %v257, %v256
    %v272 = vpack.c.b16 %v259, %v258
    %v273 = vpack.c.b16 %v261, %v260
    %v274 = vpack.c.b16 %v263, %v262
    %v275 = vpack.c.b16 %v265, %v264
    %v276 = vpack.c.b16 %v267, %v266
    %v277 = vpack.c.b16 %v269, %v268
    %286 = vmatprep.subr.bf16.mxu0 0
    %287 = vmatpush1.bf16.msra.mxu0 %v270
    %288 = vmatprep.subr.bf16.mxu0 0
    %289 = vmatpush1.bf16.msra.mxu0 %v271
    %290 = vmatprep.subr.bf16.mxu0 0
    %291 = vmatpush1.bf16.msra.mxu0 %v272
    %292 = vmatprep.subr.bf16.mxu0 0
    %293 = vmatpush1.bf16.msra.mxu0 %v273
    %294 = vmatprep.subr.bf16.mxu0 0
    %295 = vmatpush1.bf16.msra.mxu0 %v274
    %296 = vmatprep.subr.bf16.mxu0 0
    %297 = vmatpush1.bf16.msra.mxu0 %v275
    %298 = vmatprep.subr.bf16.mxu0 0
    %299 = vmatpush1.bf16.msra.mxu0 %v276
    %300 = vmatprep.subr.bf16.mxu0 0
    %301 = vmatpush1.bf16.msra.mxu0 %v277
    %302 = vmatprep.subr.bf16.mxu0 0
    %303 = vmatpush1.bf16.msra.mxu0 0
    %304 = vmatprep.subr.bf16.mxu0 0
    %305 = vmatpush1.bf16.msra.mxu0 0
    %306 = vmatprep.subr.bf16.mxu0 0
    %307 = vmatpush1.bf16.msra.mxu0 0
    %308 = vmatprep.subr.bf16.mxu0 0
    %309 = vmatpush1.bf16.msra.mxu0 0
    %310 = vmatprep.subr.bf16.mxu0 0
    %311 = vmatpush1.bf16.msra.mxu0 0
    %312 = vmatprep.subr.bf16.mxu0 0
    %313 = vmatpush1.bf16.msra.mxu0 0
    %314 = vmatprep.subr.bf16.mxu0 0
    %315 = vmatpush1.bf16.msra.mxu0 0
    %316 = vmatprep.subr.bf16.mxu0 0
    %317 = vmatpush1.bf16.msra.mxu0 0
    %318 = vmatprep.mubr.bf16.mxu0 0
    %319 = vmatmul.mubr.bf16.gmra.mrb[0].mxu0 %v217
    %v320 = vpop.f32.mrb[0].mxu0
    %v321 = vadd.f32 %v237, %v320
    %v322 = vpop.f32.mrb[0].mxu0
    %v323 = vpop.f32.mrb[0].mxu0
    %v324 = vadd.f32 %v237, %v323
    %v325 = vpop.f32.mrb[0].mxu0
    %326 = vdwg.mxu0
    %v327 = vadd.f32 %v146, %v321
    %v328 = vadd.f32 %v147, %v324
    %v329 = vsel %vm60, %v327, 0.0
    %330 = vadd.xlane.f32.xlu0 %v329
    %v331 = vpop.xlane.xlu0 %330
    %v332 = vsel %vm60, %v328, 0.0
    %333 = vadd.xlane.f32.xlu0 %v332
    %v334 = vpop.xlane.xlu0 %333
    %v335 = vmul.f32 %v331, %v115
    %v336 = vmul.f32 %v334, %v115
    %v337 = vsub.f32 %v327, %v335
    %v338 = vsub.f32 %v328, %v336
    %v339 = vmul.f32 %v337, %v337
    %v340 = vmul.f32 %v338, %v338
    %v341 = vsel %vm60, %v339, 0.0
    %342 = vadd.xlane.f32.xlu0 %v341
    %v343 = vpop.xlane.xlu0 %342
    %v344 = vsel %vm60, %v340, 0.0
    %345 = vadd.xlane.f32.xlu0 %v344
    %v346 = vpop.xlane.xlu0 %345
    %v347 = vmul.f32 %v343, %v115
    %v348 = vmul.f32 %v346, %v115
    %v349 = vadd.f32 %v347, 1e-05
    %v350 = vadd.f32 %v348, 1e-05
    %v351 = vrsqrt.pop %v349
    %v352 = vrsqrt.pop %v350
    %v353 = vmul.f32 %v337, %v351
    %v354 = vmul.f32 %v338, %v352
    %v355 = vlaneseq
    %v356 = vshrl.u32 %v355, 7
    %v357 = vsub.s32 0, %v356
    %v358 = vrot.slane %v32, %v357
    %v359 = vmul.f32 %v353, %v358
    %v360 = vmul.f32 %v354, %v358
    %v361 = vlaneseq
    %v362 = vshrl.u32 %v361, 7
    %v363 = vsub.s32 0, %v362
    %v364 = vrot.slane %v33, %v363
    %v365 = vadd.f32 %v359, %v364
    %v366 = vadd.f32 %v360, %v364
    %v367 = vstv %s27
    %v368 = vmul.f32 %v367, %v365
    %v369 = vmul.f32 %v367, %v366
    %s370 = ssub.f32 1.0, %s27
    %v371 = vstv %s370
    %v372 = vmul.f32 %v371, %v37
    %v373 = vmul.f32 %v371, %v38
    %v374 = vadd.f32 %v368, %v372
    %v375 = vadd.f32 %v369, %v373
    %v376 = vsel %vm60, %v374, 0.0
    %377 = vadd.xlane.f32.xlu0 %v376
    %v378 = vpop.xlane.xlu0 %377
    %v379 = vsel %vm60, %v375, 0.0
    %380 = vadd.xlane.f32.xlu0 %v379
    %v381 = vpop.xlane.xlu0 %380
    %v382 = vmul.f32 %v378, %v115
    %v383 = vmul.f32 %v381, %v115
    %v384 = vsub.f32 %v374, %v382
    %v385 = vsub.f32 %v375, %v383
    %v386 = vmul.f32 %v384, %v384
    %v387 = vmul.f32 %v385, %v385
    %v388 = vsel %vm60, %v386, 0.0
    %389 = vadd.xlane.f32.xlu0 %v388
    %v390 = vpop.xlane.xlu0 %389
    %v391 = vsel %vm60, %v387, 0.0
    %392 = vadd.xlane.f32.xlu0 %v391
    %v393 = vpop.xlane.xlu0 %392
    %v394 = vmul.f32 %v390, %v115
    %v395 = vmul.f32 %v393, %v115
    %v396 = vadd.f32 %v394, 1e-05
    %v397 = vadd.f32 %v395, 1e-05
    %v398 = vrsqrt.pop %v396
    %v399 = vrsqrt.pop %v397
    %v400 = vmul.f32 %v384, %v398
    %v401 = vmul.f32 %v385, %v399
    %v402 = vlaneseq
    %v403 = vshrl.u32 %v402, 7
    %v404 = vsub.s32 0, %v403
    %v405 = vrot.slane %v34, %v404
    %v406 = vmul.f32 %v400, %v405
    %v407 = vmul.f32 %v401, %v405
    %v408 = vlaneseq
    %v409 = vshrl.u32 %v408, 7
    %v410 = vsub.s32 0, %v409
    %v411 = vrot.slane %v35, %v410
    %v412 = vadd.f32 %v406, %v411
    %v413 = vadd.f32 %v407, %v411
    %414 = vst.msk [vmem:[#allocation4] sm:$0xff] %vm60, %v412
    %415 = vst.msk [vmem:[#allocation4 + $0x8] sm:$0xff] %vm60, %v413
    // Predicated region
    $region26: #{tpu_custom_call.1} parent=1 // pred_check
      _
    $region27: #{tpu_custom_call.1} parent=1 // pred_check_branch
      %417 = sbr.rel (0) target = $region29
    $region28: #{tpu_custom_call.1} parent=1 // pred_region
      %s419 = ssub.s32 256, 256
      %420 = vsyncadd [#allocation5], %s419
      %s421 = sshll.u32 [#allocation4], 4
      %s422 = int_to_ptr.vmem [resolvable:$true] %s421
      %427 = dma.vmem_to_hbm [thread:$0]  %s422, 256, %s7, [#allocation5], 128, 128, 8
    $region29: #{tpu_custom_call.1} parent=1 // pred_fallthru
      _
    // Predicated region
    $region30: #{tpu_custom_call.1} parent=1 // pred_check
      _
    $region31: #{tpu_custom_call.1} parent=1 // pred_check_branch
      %429 = sbr.rel (0) target = $region33
    $region32: #{tpu_custom_call.1} parent=1 // pred_region
      %430 = dma.done [#allocation5], 256
    $region33: #{tpu_custom_call.1} parent=1 // pred_fallthru
      _
    %431 = vsyncpa [#allocation5], 1

// kernel: tpu_custom_call.1
$region0: #{tpu_custom_call.1}
  #allocation0 [shape = 'u32[]', space=smem, size = 0x4, offset = 0x4, fixed_abs, tag = 'smem constant byte address 0x4 - core index']
  #allocation1 [shape = 'u32[144,128]{1,0:T(1,128)}', space=vmem, size = 0x12000, scoped, tag = 'internal scratch']
  #allocation2 [shape = 's32[1]{0}', space=sflag, size = 0x4, scoped, tag = 'scoped memory for tpu_custom_call.1']
  #allocation3 [shape = 'f32[1]{0:T(128)S(6)}', space=smem, size = 0x200, scoped, tag = 'prefetched SMEM operand 0']
  %s0 = inlined_call_operand.<no memory space> [shape: f32[1], index: 0, kind: input, shape index: {}]
  %s1 = inlined_call_operand.vmem [shape: f32[16,32], index: 1, kind: input, shape index: {}]
  %s2 = inlined_call_operand.vmem [shape: bf16[32,32], index: 2, kind: input, shape index: {}]
  %s3 = inlined_call_operand.vmem [shape: bf16[32,128], index: 3, kind: input, shape index: {}]
  %s4 = inlined_call_operand.vmem [shape: bf16[128,32], index: 4, kind: input, shape index: {}]
  %s5 = inlined_call_operand.vmem [shape: f32[8,32], index: 5, kind: input, shape index: {}]
  %s6 = inlined_call_operand.vmem [shape: f32[1,128], index: 6, kind: input, shape index: {}]
  %s7 = inlined_call_operand.hbm [shape: f32[16,32], index: 7, kind: output, shape index: {}]
  %s8 = sld [smem:[#allocation0]]
  $region34: #{tpu_custom_call.1} parent=0
    _
  %s10 = ssub.s32 1, %s8
  %s11 = scalar_select 0, %s10, %s8
  %12 = sst [smem:[#allocation3]] %s0
  $region1: #{tpu_custom_call.1} parent=0
    #allocation4 [shape = 'u8[8192]{0}', space=vmem, size = 0x2000, scoped, tag = 'output window, operand 0, single buffered']
    #allocation5 [shape = 's32[1]{0}', space=sflag, size = 0x4, scoped, tag = 'scoped memory for tpu_custom_call.1']
    %13 = vsyncpa [#allocation5], 0
    // Predicated region
    $region2: #{tpu_custom_call.1} parent=1 // pred_check
      _
    $region3: #{tpu_custom_call.1} parent=1 // pred_check_branch
      %15 = sbr.rel (0) target = $region5
    $region4: #{tpu_custom_call.1} parent=1 // pred_region
      _
    $region5: #{tpu_custom_call.1} parent=1 // pred_fallthru
      _
    // Predicated region
    $region6: #{tpu_custom_call.1} parent=1 // pred_check
      _
    $region7: #{tpu_custom_call.1} parent=1 // pred_check_branch
      %17 = sbr.rel (0) target = $region9
    $region8: #{tpu_custom_call.1} parent=1 // pred_region
      _
    $region9: #{tpu_custom_call.1} parent=1 // pred_fallthru
      _
    // Predicated region
    $region10: #{tpu_custom_call.1} parent=1 // pred_check
      _
    $region11: #{tpu_custom_call.1} parent=1 // pred_check_branch
      %19 = sbr.rel (0) target = $region13
    $region12: #{tpu_custom_call.1} parent=1 // pred_region
      _
    $region13: #{tpu_custom_call.1} parent=1 // pred_fallthru
      _
    // Predicated region
    $region14: #{tpu_custom_call.1} parent=1 // pred_check
      _
    $region15: #{tpu_custom_call.1} parent=1 // pred_check_branch
      %21 = sbr.rel (0) target = $region17
    $region16: #{tpu_custom_call.1} parent=1 // pred_region
      _
    $region17: #{tpu_custom_call.1} parent=1 // pred_fallthru
      _
    // Predicated region
    $region18: #{tpu_custom_call.1} parent=1 // pred_check
      _
    $region19: #{tpu_custom_call.1} parent=1 // pred_check_branch
      %23 = sbr.rel (0) target = $region21
    $region20: #{tpu_custom_call.1} parent=1 // pred_region
      _
    $region21: #{tpu_custom_call.1} parent=1 // pred_fallthru
      _
    // Predicated region
    $region22: #{tpu_custom_call.1} parent=1 // pred_check
      _
    $region23: #{tpu_custom_call.1} parent=1 // pred_check_branch
      %25 = sbr.rel (0) target = $region25
    $region24: #{tpu_custom_call.1} parent=1 // pred_region
      _
    $region25: #{tpu_custom_call.1} parent=1 // pred_fallthru
      _
    %s27 = sld [smem:[#allocation3]]
    %v28 = vld [vmem:[%s5] sm:$0x1]
    %v29 = vld [vmem:[%s5 + $0x1] sm:$0x1]
    %v30 = vld [vmem:[%s5 + $0x2] sm:$0x1]
    %v31 = vld [vmem:[%s5 + $0x3] sm:$0x1]
    %v32 = vld [vmem:[%s5 + $0x4] sm:$0x1]
    %v33 = vld [vmem:[%s5 + $0x5] sm:$0x1]
    %v34 = vld [vmem:[%s5 + $0x6] sm:$0x1]
    %v35 = vld [vmem:[%s5 + $0x7] sm:$0x1]
    %v36 = vld [vmem:[%s6] sm:$0x1]
    %v37 = vld [vmem:[%s1] sm:$0xff]
    %v38 = vld [vmem:[%s1 + $0x8] sm:$0xff]
    %v39 = vpack.c.bf16 %v38, %v37
    %v40 = vld [vmem:[%s2] sm:$0xf]
    %v41 = vld [vmem:[%s2 + $0x4] sm:$0xf]
    %v42 = vld [vmem:[%s2 + $0x8] sm:$0xf]
    %v43 = vld [vmem:[%s2 + $0xc] sm:$0xf]
    %v44 = vlaneseq
    %v45 = vshrl.u32 %v44, 7
    %v46 = vsub.s32 0, %v45
    %v47 = vrot.slane %v28, %v46
    %v52 = vunpack.c.l.b16 %v40
    %v53 = vunpack.c.l.b16 %v41
    %v54 = vunpack.c.l.b16 %v42
    %v55 = vunpack.c.l.b16 %v43
    %v56 = vpack.c.b16 %v53, %v52
    %v57 = vpack.c.b16 %v55, %v54
    %vm60 = vcmask 261120
    %v62 = vsel %vm60, %v39, 0
    %64 = vmatprep.subr.bf16.mxu0 0
    %65 = vmatpush1.bf16.msra.mxu0 %v56
    %66 = vmatprep.subr.bf16.mxu0 0
    %67 = vmatpush1.bf16.msra.mxu0 %v57
    %68 = vmatprep.subr.bf16.mxu0 0
    %69 = vmatpush1.bf16.msra.mxu0 0
    %70 = vmatprep.subr.bf16.mxu0 0
    %71 = vmatpush1.bf16.msra.mxu0 0
    %72 = vmatprep.subr.bf16.mxu0 0
    %73 = vmatpush1.bf16.msra.mxu0 0
    %74 = vmatprep.subr.bf16.mxu0 0
    %75 = vmatpush1.bf16.msra.mxu0 0
    %76 = vmatprep.subr.bf16.mxu0 0
    %77 = vmatpush1.bf16.msra.mxu0 0
    %78 = vmatprep.subr.bf16.mxu0 0
    %79 = vmatpush1.bf16.msra.mxu0 0
    %80 = vmatprep.subr.bf16.mxu0 0
    %81 = vmatpush1.bf16.msra.mxu0 0
    %82 = vmatprep.subr.bf16.mxu0 0
    %83 = vmatpush1.bf16.msra.mxu0 0
    %84 = vmatprep.subr.bf16.mxu0 0
    %85 = vmatpush1.bf16.msra.mxu0 0
    %86 = vmatprep.subr.bf16.mxu0 0
    %87 = vmatpush1.bf16.msra.mxu0 0
    %88 = vmatprep.subr.bf16.mxu0 0
    %89 = vmatpush1.bf16.msra.mxu0 0
    %90 = vmatprep.subr.bf16.mxu0 0
    %91 = vmatpush1.bf16.msra.mxu0 0
    %92 = vmatprep.subr.bf16.mxu0 0
    %93 = vmatpush1.bf16.msra.mxu0 0
    %94 = vmatprep.subr.bf16.mxu0 0
    %95 = vmatpush1.bf16.msra.mxu0 0
    %96 = vmatprep.mubr.bf16.mxu0 0
    %97 = vmatmul.mubr.bf16.gmra.mrb[0].mxu0 %v62
    %v98 = vpop.f32.mrb[0].mxu0
    %v99 = vadd.f32 %v47, %v98
    %v100 = vpop.f32.mrb[0].mxu0
    %v101 = vpop.f32.mrb[0].mxu0
    %v102 = vadd.f32 %v47, %v101
    %v103 = vpop.f32.mrb[0].mxu0
    %104 = vdwg.mxu0
    %v105 = vadd.f32 %v37, %v99
    %v106 = vadd.f32 %v38, %v102
    %v107 = vmax.f32 %v105, 0.0
    %v108 = vmax.f32 %v106, 0.0
    %v109 = vsel %vm60, %v107, 0.0
    %110 = vadd.xlane.f32.xlu0 %v109
    %v111 = vpop.xlane.xlu0 %110
    %v112 = vsel %vm60, %v108, 0.0
    %113 = vadd.xlane.f32.xlu0 %v112
    %v114 = vpop.xlane.xlu0 %113
    %v115 = vrcp.pop 32.0
    %v116 = vmul.f32 %v111, %v115
    %v117 = vmul.f32 %v114, %v115
    %v118 = vsub.f32 %v107, %v116
    %v119 = vsub.f32 %v108, %v117
    %v120 = vmul.f32 %v118, %v118
    %v121 = vmul.f32 %v119, %v119
    %v122 = vsel %vm60, %v120, 0.0
    %123 = vadd.xlane.f32.xlu0 %v122
    %v124 = vpop.xlane.xlu0 %123
    %v125 = vsel %vm60, %v121, 0.0
    %126 = vadd.xlane.f32.xlu0 %v125
    %v127 = vpop.xlane.xlu0 %126
    %v128 = vmul.f32 %v124, %v115
    %v129 = vmul.f32 %v127, %v115
    %v130 = vadd.f32 %v128, 1e-05
    %v131 = vadd.f32 %v129, 1e-05
    %v132 = vrsqrt.pop %v130
    %v133 = vrsqrt.pop %v131
    %v134 = vmul.f32 %v118, %v132
    %v135 = vmul.f32 %v119, %v133
    %v136 = vlaneseq
    %v137 = vshrl.u32 %v136, 7
    %v138 = vsub.s32 0, %v137
    %v139 = vrot.slane %v30, %v138
    %v140 = vmul.f32 %v134, %v139
    %v141 = vmul.f32 %v135, %v139
    %v142 = vlaneseq
    %v143 = vshrl.u32 %v142, 7
    %v144 = vsub.s32 0, %v143
    %v145 = vrot.slane %v31, %v144
    %v146 = vadd.f32 %v140, %v145
    %v147 = vadd.f32 %v141, %v145
    %v148 = vpack.c.bf16 %v147, %v146
    %v149 = vld [vmem:[%s3] sm:$0xf]
    %v150 = vld [vmem:[%s3 + $0x4] sm:$0xf]
    %v151 = vld [vmem:[%s3 + $0x8] sm:$0xf]
    %v152 = vld [vmem:[%s3 + $0xc] sm:$0xf]
    %v154 = vlaneseq
    %v155 = vshrl.u32 %v154, 7
    %v156 = vsub.s32 0, %v155
    %v157 = vrot.slane %v36, %v156
    %v163 = vunpack.c.l.b16 %v149
    %v164 = vunpack.c.l.b16 %v150
    %v165 = vunpack.c.l.b16 %v151
    %v166 = vunpack.c.l.b16 %v152
    %v167 = vpack.c.b16 %v164, %v163
    %v168 = vpack.c.b16 %v166, %v165
    %v172 = vsel %vm60, %v148, 0
    %174 = vmatprep.subr.bf16.mxu0 0
    %175 = vmatpush1.bf16.msra.mxu0 %v167
    %176 = vmatprep.subr.bf16.mxu0 0
    %177 = vmatpush1.bf16.msra.mxu0 %v168
    %178 = vmatprep.subr.bf16.mxu0 0
    %179 = vmatpush1.bf16.msra.mxu0 0
    %180 = vmatprep.subr.bf16.mxu0 0
    %181 = vmatpush1.bf16.msra.mxu0 0
    %182 = vmatprep.subr.bf16.mxu0 0
    %183 = vmatpush1.bf16.msra.mxu0 0
    %184 = vmatprep.subr.bf16.mxu0 0
    %185 = vmatpush1.bf16.msra.mxu0 0
    %186 = vmatprep.subr.bf16.mxu0 0
    %187 = vmatpush1.bf16.msra.mxu0 0
    %188 = vmatprep.subr.bf16.mxu0 0
    %189 = vmatpush1.bf16.msra.mxu0 0
    %190 = vmatprep.subr.bf16.mxu0 0
    %191 = vmatpush1.bf16.msra.mxu0 0
    %192 = vmatprep.subr.bf16.mxu0 0
    %193 = vmatpush1.bf16.msra.mxu0 0
    %194 = vmatprep.subr.bf16.mxu0 0
    %195 = vmatpush1.bf16.msra.mxu0 0
    %196 = vmatprep.subr.bf16.mxu0 0
    %197 = vmatpush1.bf16.msra.mxu0 0
    %198 = vmatprep.subr.bf16.mxu0 0
    %199 = vmatpush1.bf16.msra.mxu0 0
    %200 = vmatprep.subr.bf16.mxu0 0
    %201 = vmatpush1.bf16.msra.mxu0 0
    %202 = vmatprep.subr.bf16.mxu0 0
    %203 = vmatpush1.bf16.msra.mxu0 0
    %204 = vmatprep.subr.bf16.mxu0 0
    %205 = vmatpush1.bf16.msra.mxu0 0
    %206 = vmatprep.mubr.bf16.mxu0 0
    %207 = vmatmul.mubr.bf16.gmra.mrb[0].mxu0 %v172
    %v208 = vpop.f32.mrb[0].mxu0
    %v209 = vadd.f32 %v157, %v208
    %v210 = vpop.f32.mrb[0].mxu0
    %v211 = vpop.f32.mrb[0].mxu0
    %v212 = vadd.f32 %v157, %v211
    %v213 = vpop.f32.mrb[0].mxu0
    %214 = vdwg.mxu0
    %v215 = vmax.f32 %v209, 0.0
    %v216 = vmax.f32 %v212, 0.0
    %v217 = vpack.c.bf16 %v216, %v215
    %v218 = vld [vmem:[%s4] sm:$0xf]
    %v219 = vld [vmem:[%s4 + $0x4] sm:$0xf]
    %v220 = vld [vmem:[%s4 + $0x8] sm:$0xf]
    %v221 = vld [vmem:[%s4 + $0xc] sm:$0xf]
    %v222 = vld [vmem:[%s4 + $0x10] sm:$0xf]
    %v223 = vld [vmem:[%s4 + $0x14] sm:$0xf]
    %v224 = vld [vmem:[%s4 + $0x18] sm:$0xf]
    %v225 = vld [vmem:[%s4 + $0x1c] sm:$0xf]
    %v226 = vld [vmem:[%s4 + $0x20] sm:$0xf]
    %v227 = vld [vmem:[%s4 + $0x24] sm:$0xf]
    %v228 = vld [vmem:[%s4 + $0x28] sm:$0xf]
    %v229 = vld [vmem:[%s4 + $0x2c] sm:$0xf]
    %v230 = vld [vmem:[%s4 + $0x30] sm:$0xf]
    %v231 = vld [vmem:[%s4 + $0x34] sm:$0xf]
    %v232 = vld [vmem:[%s4 + $0x38] sm:$0xf]
    %v233 = vld [vmem:[%s4 + $0x3c] sm:$0xf]
    %v234 = vlaneseq
    %v235 = vshrl.u32 %v234, 7
    %v236 = vsub.s32 0, %v235
    %v237 = vrot.slane %v29, %v236
    %v254 = vunpack.c.l.b16 %v218
    %v255 = vunpack.c.l.b16 %v219
    %v256 = vunpack.c.l.b16 %v220
    %v257 = vunpack.c.l.b16 %v221
    %v258 = vunpack.c.l.b16 %v222
    %v259 = vunpack.c.l.b16 %v223
    %v260 = vunpack.c.l.b16 %v224
    %v261 = vunpack.c.l.b16 %v225
    %v262 = vunpack.c.l.b16 %v226
    %v263 = vunpack.c.l.b16 %v227
    %v264 = vunpack.c.l.b16 %v228
    %v265 = vunpack.c.l.b16 %v229
    %v266 = vunpack.c.l.b16 %v230
    %v267 = vunpack.c.l.b16 %v231
    %v268 = vunpack.c.l.b16 %v232
    %v269 = vunpack.c.l.b16 %v233
    %v270 = vpack.c.b16 %v255, %v254
    %v271 = vpack.c.b16 %v257, %v256
    %v272 = vpack.c.b16 %v259, %v258
    %v273 = vpack.c.b16 %v261, %v260
    %v274 = vpack.c.b16 %v263, %v262
    %v275 = vpack.c.b16 %v265, %v264
    %v276 = vpack.c.b16 %v267, %v266
    %v277 = vpack.c.b16 %v269, %v268
    %286 = vmatprep.subr.bf16.mxu0 0
    %287 = vmatpush1.bf16.msra.mxu0 %v270
    %288 = vmatprep.subr.bf16.mxu0 0
    %289 = vmatpush1.bf16.msra.mxu0 %v271
    %290 = vmatprep.subr.bf16.mxu0 0
    %291 = vmatpush1.bf16.msra.mxu0 %v272
    %292 = vmatprep.subr.bf16.mxu0 0
    %293 = vmatpush1.bf16.msra.mxu0 %v273
    %294 = vmatprep.subr.bf16.mxu0 0
    %295 = vmatpush1.bf16.msra.mxu0 %v274
    %296 = vmatprep.subr.bf16.mxu0 0
    %297 = vmatpush1.bf16.msra.mxu0 %v275
    %298 = vmatprep.subr.bf16.mxu0 0
    %299 = vmatpush1.bf16.msra.mxu0 %v276
    %300 = vmatprep.subr.bf16.mxu0 0
    %301 = vmatpush1.bf16.msra.mxu0 %v277
    %302 = vmatprep.subr.bf16.mxu0 0
    %303 = vmatpush1.bf16.msra.mxu0 0
    %304 = vmatprep.subr.bf16.mxu0 0
    %305 = vmatpush1.bf16.msra.mxu0 0
    %306 = vmatprep.subr.bf16.mxu0 0
    %307 = vmatpush1.bf16.msra.mxu0 0
    %308 = vmatprep.subr.bf16.mxu0 0
    %309 = vmatpush1.bf16.msra.mxu0 0
    %310 = vmatprep.subr.bf16.mxu0 0
    %311 = vmatpush1.bf16.msra.mxu0 0
    %312 = vmatprep.subr.bf16.mxu0 0
    %313 = vmatpush1.bf16.msra.mxu0 0
    %314 = vmatprep.subr.bf16.mxu0 0
    %315 = vmatpush1.bf16.msra.mxu0 0
    %316 = vmatprep.subr.bf16.mxu0 0
    %317 = vmatpush1.bf16.msra.mxu0 0
    %318 = vmatprep.mubr.bf16.mxu0 0
    %319 = vmatmul.mubr.bf16.gmra.mrb[0].mxu0 %v217
    %v320 = vpop.f32.mrb[0].mxu0
    %v321 = vadd.f32 %v237, %v320
    %v322 = vpop.f32.mrb[0].mxu0
    %v323 = vpop.f32.mrb[0].mxu0
    %v324 = vadd.f32 %v237, %v323
    %v325 = vpop.f32.mrb[0].mxu0
    %326 = vdwg.mxu0
    %v327 = vadd.f32 %v146, %v321
    %v328 = vadd.f32 %v147, %v324
    %v329 = vsel %vm60, %v327, 0.0
    %330 = vadd.xlane.f32.xlu0 %v329
    %v331 = vpop.xlane.xlu0 %330
    %v332 = vsel %vm60, %v328, 0.0
    %333 = vadd.xlane.f32.xlu0 %v332
    %v334 = vpop.xlane.xlu0 %333
    %v335 = vmul.f32 %v331, %v115
    %v336 = vmul.f32 %v334, %v115
    %v337 = vsub.f32 %v327, %v335
    %v338 = vsub.f32 %v328, %v336
    %v339 = vmul.f32 %v337, %v337
    %v340 = vmul.f32 %v338, %v338
    %v341 = vsel %vm60, %v339, 0.0
    %342 = vadd.xlane.f32.xlu0 %v341
    %v343 = vpop.xlane.xlu0 %342
    %v344 = vsel %vm60, %v340, 0.0
    %345 = vadd.xlane.f32.xlu0 %v344
    %v346 = vpop.xlane.xlu0 %345
    %v347 = vmul.f32 %v343, %v115
    %v348 = vmul.f32 %v346, %v115
    %v349 = vadd.f32 %v347, 1e-05
    %v350 = vadd.f32 %v348, 1e-05
    %v351 = vrsqrt.pop %v349
    %v352 = vrsqrt.pop %v350
    %v353 = vmul.f32 %v337, %v351
    %v354 = vmul.f32 %v338, %v352
    %v355 = vlaneseq
    %v356 = vshrl.u32 %v355, 7
    %v357 = vsub.s32 0, %v356
    %v358 = vrot.slane %v32, %v357
    %v359 = vmul.f32 %v353, %v358
    %v360 = vmul.f32 %v354, %v358
    %v361 = vlaneseq
    %v362 = vshrl.u32 %v361, 7
    %v363 = vsub.s32 0, %v362
    %v364 = vrot.slane %v33, %v363
    %v365 = vadd.f32 %v359, %v364
    %v366 = vadd.f32 %v360, %v364
    %v367 = vstv %s27
    %v368 = vmul.f32 %v367, %v365
    %v369 = vmul.f32 %v367, %v366
    %s370 = ssub.f32 1.0, %s27
    %v371 = vstv %s370
    %v372 = vmul.f32 %v371, %v37
    %v373 = vmul.f32 %v371, %v38
    %v374 = vadd.f32 %v368, %v372
    %v375 = vadd.f32 %v369, %v373
    %v376 = vsel %vm60, %v374, 0.0
    %377 = vadd.xlane.f32.xlu0 %v376
    %v378 = vpop.xlane.xlu0 %377
    %v379 = vsel %vm60, %v375, 0.0
    %380 = vadd.xlane.f32.xlu0 %v379
    %v381 = vpop.xlane.xlu0 %380
    %v382 = vmul.f32 %v378, %v115
    %v383 = vmul.f32 %v381, %v115
    %v384 = vsub.f32 %v374, %v382
    %v385 = vsub.f32 %v375, %v383
    %v386 = vmul.f32 %v384, %v384
    %v387 = vmul.f32 %v385, %v385
    %v388 = vsel %vm60, %v386, 0.0
    %389 = vadd.xlane.f32.xlu0 %v388
    %v390 = vpop.xlane.xlu0 %389
    %v391 = vsel %vm60, %v387, 0.0
    %392 = vadd.xlane.f32.xlu0 %v391
    %v393 = vpop.xlane.xlu0 %392
    %v394 = vmul.f32 %v390, %v115
    %v395 = vmul.f32 %v393, %v115
    %v396 = vadd.f32 %v394, 1e-05
    %v397 = vadd.f32 %v395, 1e-05
    %v398 = vrsqrt.pop %v396
    %v399 = vrsqrt.pop %v397
    %v400 = vmul.f32 %v384, %v398
    %v401 = vmul.f32 %v385, %v399
    %v402 = vlaneseq
    %v403 = vshrl.u32 %v402, 7
    %v404 = vsub.s32 0, %v403
    %v405 = vrot.slane %v34, %v404
    %v406 = vmul.f32 %v400, %v405
    %v407 = vmul.f32 %v401, %v405
    %v408 = vlaneseq
    %v409 = vshrl.u32 %v408, 7
    %v410 = vsub.s32 0, %v409
    %v411 = vrot.slane %v35, %v410
    %v412 = vadd.f32 %v406, %v411
    %v413 = vadd.f32 %v407, %v411
    %414 = vst.msk [vmem:[#allocation4] sm:$0xff] %vm60, %v412
    %415 = vst.msk [vmem:[#allocation4 + $0x8] sm:$0xff] %vm60, %v413
    // Predicated region
    $region26: #{tpu_custom_call.1} parent=1 // pred_check
      _
    $region27: #{tpu_custom_call.1} parent=1 // pred_check_branch
      %417 = sbr.rel (0) target = $region29
    $region28: #{tpu_custom_call.1} parent=1 // pred_region
      %s419 = ssub.s32 256, 256
      %420 = vsyncadd [#allocation5], %s419
      %s421 = sshll.u32 [#allocation4], 4
      %s422 = int_to_ptr.vmem [resolvable:$true] %s421
      %427 = dma.vmem_to_hbm [thread:$0]  %s422, 256, %s7, [#allocation5], 128, 128, 8
    $region29: #{tpu_custom_call.1} parent=1 // pred_fallthru
      _
    // Predicated region
    $region30: #{tpu_custom_call.1} parent=1 // pred_check
      _
    $region31: #{tpu_custom_call.1} parent=1 // pred_check_branch
      %429 = sbr.rel (0) target = $region33
    $region32: #{tpu_custom_call.1} parent=1 // pred_region
      %430 = dma.done [#allocation5], 256
    $region33: #{tpu_custom_call.1} parent=1 // pred_fallthru
      _
    %431 = vsyncpa [#allocation5], 1

</llo_original>
